<compile_context>
chip_gen: v7x
topology: tpu7x:2x2x1
jax: 0.10.0
libtpu: 0.0.40
codegen_flags: <defaults>
</compile_context>

<pallas_src>
import functools

import jax
import jax.numpy as jnp
from jax.experimental import pallas as pl
from jax.experimental.pallas import tpu as pltpu

HIDDEN = 128
OUT_PAD = 128          # lane-dense padded output width (advantage lanes + value + zeros)
BATCH_TILE = 512       # max batch rows per grid step


def _round_up(x, m):
    return ((x + m - 1) // m) * m


def dueling_kernel(x_ref, w1_ref, b1_ref, wh1_ref, bh1_ref, wh2_ref, bh2_ref, q_ref):
    """Three matmuls, bias + ReLU, lane-dense store. Dueling combine is pre-folded
    into wh2/bh2, so there is no epilogue work here."""
    # ---- feature layer: Linear(in_dim, 128) + ReLU  (bf16 operands, f32 acc) ----
    feature = jnp.dot(x_ref[...], w1_ref[...],
                      preferred_element_type=jnp.float32) + b1_ref[...]
    feature = jnp.maximum(feature, 0.0)                        # (TB, 128) f32

    # ---- fused head hidden layers: Linear(128, 256) + ReLU ----
    #      columns [0,128) = advantage hidden, [128,256) = value hidden
    h = jnp.dot(feature.astype(jnp.bfloat16), wh1_ref[...],
                preferred_element_type=jnp.float32) + bh1_ref[...]
    h = jnp.maximum(h, 0.0)                                    # (TB, 256) f32

    # ---- fused output heads with dueling combine folded into the weights ----
    #      lanes [0,out_dim) already hold V + A - mean(A); remaining lanes are 0
    q = jnp.dot(h.astype(jnp.bfloat16), wh2_ref[...],
                preferred_element_type=jnp.float32) + bh2_ref[...]

    q_ref[...] = q.astype(q_ref.dtype)                         # (TB, 128) lane-dense


def pack_params(params, out_dim):
    """Fuse, fold the dueling combine, and cast parameters ONCE (outside the
    per-forward path)."""
    assert out_dim <= OUT_PAD - 1, "out_dim must fit in the padded output width"

    w1 = params["w1"].astype(jnp.bfloat16)                              # (in, 128)
    b1 = params["b1"].astype(jnp.float32)                               # (1, 128)

    wh1 = jnp.concatenate([params["wa1"], params["wv1"]], axis=1)       # (128, 256)
    bh1 = jnp.concatenate([params["ba1"], params["bv1"]], axis=1)       # (1, 256)

    # Block-structured raw output weight: advantage block + value column.
    wh2_raw = jnp.zeros((2 * HIDDEN, OUT_PAD), jnp.float32)
    wh2_raw = wh2_raw.at[:HIDDEN, :out_dim].set(params["wa2"].astype(jnp.float32))
    wh2_raw = wh2_raw.at[HIDDEN:, out_dim].set(params["wv2"][:, 0].astype(jnp.float32))
    bh2_raw = jnp.zeros((1, OUT_PAD), jnp.float32)
    bh2_raw = bh2_raw.at[:, :out_dim].set(params["ba2"][0].astype(jnp.float32))
    bh2_raw = bh2_raw.at[:, out_dim].set(params["bv2"][0, 0].astype(jnp.float32))

    # Dueling combine matrix M (f32): q = q_pre @ M with q_j = V + A_j - mean(A).
    #   M[j,j] = 1 - 1/out_dim,  M[k,j] = -1/out_dim (k != j, k < out_dim),
    #   M[out_dim, j] = 1, all other entries / columns 0.
    m = jnp.zeros((OUT_PAD, OUT_PAD), jnp.float32)
    idx = jnp.arange(out_dim)
    m = m.at[idx, idx].set(1.0)
    m = m.at[:out_dim, :out_dim].add(-1.0 / out_dim)
    m = m.at[out_dim, :out_dim].set(1.0)

    wh2 = (wh2_raw @ m).astype(jnp.bfloat16)                            # (256, 128)
    bh2 = (bh2_raw @ m).astype(jnp.float32)                             # (1, 128)

    return (w1, b1,
            wh1.astype(jnp.bfloat16), bh1.astype(jnp.float32),
            wh2, bh2)


def _batch_spec(shape, buffers):
    if buffers is None:
        return pl.BlockSpec(shape, lambda i: (i, 0))
    return pl.BlockSpec(shape, lambda i: (i, 0), pipeline_mode=pl.Buffered(buffers))


@functools.partial(jax.jit, static_argnames=("out_dim", "out_dtype"))
def dueling_forward(x, packed, out_dim, out_dtype=jnp.float32):
    """Forward pass. `packed` is the result of pack_params (reused across calls)."""
    w1, b1, wh1, bh1, wh2, bh2 = packed
    B, in_dim = x.shape

    # Pad batch to a bf16-sublane-friendly multiple of 16; for non-tiny batches
    # cap the tile at ceil(batch/2) so the "parallel" grid has >= 2 steps
    # (v7x megacore) while never exceeding BATCH_TILE.
    b_pad = _round_up(max(B, 16), 16)
    if b_pad > 16:
        tb = min(BATCH_TILE, _round_up(pl.cdiv(b_pad, 2), 16))
    else:
        tb = b_pad
    b_pad = _round_up(b_pad, tb)
    num_steps = b_pad // tb

    x_bf = x.astype(jnp.bfloat16)
    if b_pad != B:
        x_bf = jnp.pad(x_bf, ((0, b_pad - B), (0, 0)))   # remainder rows only

    flops = 2 * b_pad * (in_dim * HIDDEN + HIDDEN * 2 * HIDDEN + 2 * HIDDEN * OUT_PAD)
    bytes_accessed = (x_bf.size * 2 + w1.size * 2 + wh1.size * 2 + wh2.size * 2
                      + (b1.size + bh1.size + bh2.size) * 4
                      + b_pad * OUT_PAD * jnp.dtype(out_dtype).itemsize)

    # Multi-buffer only the batch-streamed operands, and only when the grid is
    # long enough for it to matter; weights keep constant block index (resident).
    buffers = 3 if num_steps >= 3 else None

    q_pad = pl.pallas_call(
        dueling_kernel,
        out_shape=jax.ShapeDtypeStruct((b_pad, OUT_PAD), out_dtype),
        grid_spec=pl.GridSpec(
            grid=(num_steps,),
            in_specs=[
                _batch_spec((tb, in_dim), buffers),            # x tile (streamed)
                pl.BlockSpec(w1.shape, lambda i: (0, 0)),      # weights: VMEM-resident
                pl.BlockSpec(b1.shape, lambda i: (0, 0)),
                pl.BlockSpec(wh1.shape, lambda i: (0, 0)),
                pl.BlockSpec(bh1.shape, lambda i: (0, 0)),
                pl.BlockSpec(wh2.shape, lambda i: (0, 0)),
                pl.BlockSpec(bh2.shape, lambda i: (0, 0)),
            ],
            out_specs=_batch_spec((tb, OUT_PAD), buffers),
        ),
        compiler_params=pltpu.CompilerParams(
            dimension_semantics=("parallel",)),   # shards batch tiles across v7x's 2 TCs
        cost_estimate=pl.CostEstimate(flops=flops, transcendentals=0,
                                      bytes_accessed=bytes_accessed),
    )(x_bf, w1, b1, wh1, bh1, wh2, bh2)

    return q_pad[:B, :out_dim]


def init_params(key, in_dim, out_dim):
    """Deterministic param init (shapes follow the nn.Module __init__)."""
    ks = jax.random.split(key, 10)

    def linear(kw, kb, fan_in, fan_out):
        bound = 1.0 / jnp.sqrt(fan_in)
        w = jax.random.uniform(kw, (fan_in, fan_out), jnp.float32, -bound, bound)
        b = jax.random.uniform(kb, (1, fan_out), jnp.float32, -bound, bound)
        return w, b

    w1, b1 = linear(ks[0], ks[1], in_dim, HIDDEN)
    wa1, ba1 = linear(ks[2], ks[3], HIDDEN, HIDDEN)
    wa2, ba2 = linear(ks[4], ks[5], HIDDEN, out_dim)
    wv1, bv1 = linear(ks[6], ks[7], HIDDEN, HIDDEN)
    wv2, bv2 = linear(ks[8], ks[9], HIDDEN, 1)
    return dict(w1=w1, b1=b1, wa1=wa1, ba1=ba1, wa2=wa2, ba2=ba2,
                wv1=wv1, bv1=bv1, wv2=wv2, bv2=bv2)


def reference_forward_f32(x, p):
    """Plain-JAX f32 reference mirroring the PyTorch module."""
    feature = jnp.maximum(x @ p["w1"] + p["b1"], 0.0)
    ha = jnp.maximum(feature @ p["wa1"] + p["ba1"], 0.0)
    advantage = ha @ p["wa2"] + p["ba2"]
    hv = jnp.maximum(feature @ p["wv1"] + p["bv1"], 0.0)
    value = hv @ p["wv2"] + p["bv2"]
    return value + advantage - advantage.mean(axis=-1, keepdims=True)


def reference_forward_bf16(x, p):
    """Reference with the same bf16-operand / f32-accumulate precision as the kernel."""
    d = lambda a, w: jnp.dot(a.astype(jnp.bfloat16), w.astype(jnp.bfloat16),
                             preferred_element_type=jnp.float32)
    feature = jnp.maximum(d(x, p["w1"]) + p["b1"], 0.0)
    ha = jnp.maximum(d(feature, p["wa1"]) + p["ba1"], 0.0)
    advantage = d(ha, p["wa2"]) + p["ba2"]
    hv = jnp.maximum(d(feature, p["wv1"]) + p["bv1"], 0.0)
    value = d(hv, p["wv2"]) + p["bv2"]
    return value + advantage - advantage.mean(axis=-1, keepdims=True)


if __name__ == "__main__":
    key = jax.random.PRNGKey(0)
    kx, kp = jax.random.split(key)

    B, in_dim, out_dim = 8, 16, 8
    x = jax.random.normal(kx, (B, in_dim), jnp.float32)
    params = init_params(kp, in_dim, out_dim)

    # Pack / fuse / fold / cast weights ONCE (hoisted off the per-forward path).
    packed = pack_params(params, out_dim)

    q = jax.block_until_ready(dueling_forward(x, packed, out_dim))

    q_bf = reference_forward_bf16(x, params)
    q_f32 = reference_forward_f32(x, params)

    assert q.shape == (B, out_dim)
    # Combine is folded through bf16-rounded weights -> slightly looser than before.
    assert jnp.allclose(q, q_bf, atol=3e-2, rtol=3e-2), "mismatch vs bf16 reference"
    assert jnp.allclose(q, q_f32, atol=1.5e-1, rtol=1.5e-1), "mismatch vs f32 reference"

    print("KERNEL_OK")
</pallas_src>

<mosaic_0001>
module attributes {stable_mosaic.version = 11 : i64} {
  func.func @dueling_kernel(%arg0: i32, %arg1: memref<16x16xbf16, #tpu.memory_space<vmem>>, %arg2: memref<16x128xbf16, #tpu.memory_space<vmem>>, %arg3: memref<1x128xf32, #tpu.memory_space<vmem>>, %arg4: memref<128x256xbf16, #tpu.memory_space<vmem>>, %arg5: memref<1x256xf32, #tpu.memory_space<vmem>>, %arg6: memref<256x128xbf16, #tpu.memory_space<vmem>>, %arg7: memref<1x128xf32, #tpu.memory_space<vmem>>, %arg8: memref<16x128xf32, #tpu.memory_space<vmem>>) attributes {dimension_semantics = [#tpu.dimension_semantics<parallel>], iteration_bounds = array<i64: 1>, scalar_prefetch = 0 : i64, scratch_operands = 0 : i64, tpu.core_type = #tpu.core_type<tc>, window_params = [{transform_indices = @transform_0, window_bounds = array<i64: 16, 16>}, {pipeline_mode = #tpu.pipeline_mode<synchronous>, transform_indices = @transform_1, window_bounds = array<i64: 16, 128>}, {pipeline_mode = #tpu.pipeline_mode<synchronous>, transform_indices = @transform_2, window_bounds = array<i64: 1, 128>}, {pipeline_mode = #tpu.pipeline_mode<synchronous>, transform_indices = @transform_3, window_bounds = array<i64: 128, 256>}, {pipeline_mode = #tpu.pipeline_mode<synchronous>, transform_indices = @transform_4, window_bounds = array<i64: 1, 256>}, {pipeline_mode = #tpu.pipeline_mode<synchronous>, transform_indices = @transform_5, window_bounds = array<i64: 256, 128>}, {pipeline_mode = #tpu.pipeline_mode<synchronous>, transform_indices = @transform_6, window_bounds = array<i64: 1, 128>}, {transform_indices = @transform_7, window_bounds = array<i64: 16, 128>}]} {
    %c0 = arith.constant 0 : index
    %c0_0 = arith.constant 0 : index
    %0 = vector.load %arg1[%c0, %c0_0] : memref<16x16xbf16, #tpu.memory_space<vmem>>, vector<16x16xbf16>
    %c0_1 = arith.constant 0 : index
    %c0_2 = arith.constant 0 : index
    %1 = vector.load %arg2[%c0_1, %c0_2] : memref<16x128xbf16, #tpu.memory_space<vmem>>, vector<16x128xbf16>
    %cst = arith.constant dense<0.000000e+00> : vector<16x128xf32>
    %2 = tpu.matmul %0, %1, %cst {dimension_numbers = #tpu.dot_dimension_numbers<[1], [0], [0], [1], [0, 0, 1, 1], [], []>} : vector<16x16xbf16>, vector<16x128xbf16>, vector<16x128xf32> -> vector<16x128xf32>
    %c0_3 = arith.constant 0 : index
    %c0_4 = arith.constant 0 : index
    %3 = vector.load %arg3[%c0_3, %c0_4] : memref<1x128xf32, #tpu.memory_space<vmem>>, vector<1x128xf32>
    %4 = vector.broadcast %3 : vector<1x128xf32> to vector<16x128xf32>
    %5 = arith.addf %2, %4 : vector<16x128xf32>
    %cst_5 = arith.constant 0.000000e+00 : f32
    %6 = vector.broadcast %cst_5 : f32 to vector<16x128xf32>
    %7 = arith.maximumf %5, %6 : vector<16x128xf32>
    %8 = arith.truncf %7 : vector<16x128xf32> to vector<16x128xbf16>
    %c0_6 = arith.constant 0 : index
    %c0_7 = arith.constant 0 : index
    %9 = vector.load %arg4[%c0_6, %c0_7] : memref<128x256xbf16, #tpu.memory_space<vmem>>, vector<128x256xbf16>
    %cst_8 = arith.constant dense<0.000000e+00> : vector<16x256xf32>
    %10 = tpu.matmul %8, %9, %cst_8 {dimension_numbers = #tpu.dot_dimension_numbers<[1], [0], [0], [1], [0, 0, 1, 1], [], []>} : vector<16x128xbf16>, vector<128x256xbf16>, vector<16x256xf32> -> vector<16x256xf32>
    %c0_9 = arith.constant 0 : index
    %c0_10 = arith.constant 0 : index
    %11 = vector.load %arg5[%c0_9, %c0_10] : memref<1x256xf32, #tpu.memory_space<vmem>>, vector<1x256xf32>
    %12 = vector.broadcast %11 : vector<1x256xf32> to vector<16x256xf32>
    %13 = arith.addf %10, %12 : vector<16x256xf32>
    %cst_11 = arith.constant 0.000000e+00 : f32
    %14 = vector.broadcast %cst_11 : f32 to vector<16x256xf32>
    %15 = arith.maximumf %13, %14 : vector<16x256xf32>
    %16 = arith.truncf %15 : vector<16x256xf32> to vector<16x256xbf16>
    %c0_12 = arith.constant 0 : index
    %c0_13 = arith.constant 0 : index
    %17 = vector.load %arg6[%c0_12, %c0_13] : memref<256x128xbf16, #tpu.memory_space<vmem>>, vector<256x128xbf16>
    %cst_14 = arith.constant dense<0.000000e+00> : vector<16x128xf32>
    %18 = tpu.matmul %16, %17, %cst_14 {dimension_numbers = #tpu.dot_dimension_numbers<[1], [0], [0], [1], [0, 0, 1, 1], [], []>} : vector<16x256xbf16>, vector<256x128xbf16>, vector<16x128xf32> -> vector<16x128xf32>
    %c0_15 = arith.constant 0 : index
    %c0_16 = arith.constant 0 : index
    %19 = vector.load %arg7[%c0_15, %c0_16] : memref<1x128xf32, #tpu.memory_space<vmem>>, vector<1x128xf32>
    %20 = vector.broadcast %19 : vector<1x128xf32> to vector<16x128xf32>
    %21 = arith.addf %18, %20 : vector<16x128xf32>
    %c0_17 = arith.constant 0 : index
    %c0_18 = arith.constant 0 : index
    %22 = vector.load %arg8[%c0_17, %c0_18] : memref<16x128xf32, #tpu.memory_space<vmem>>, vector<16x128xf32>
    tpu.vector_store %arg8[%c0_17, %c0_18], %21 {strides = array<i32>} : memref<16x128xf32, #tpu.memory_space<vmem>>, vector<16x128xf32>,
    return
  }
  func.func @transform_0(%arg0: i32) -> (i32, i32) {
    %c0_i32 = arith.constant 0 : i32
    %c0_i32_0 = arith.constant 0 : i32
    return %arg0, %c0_i32 : i32, i32
  }
  func.func @transform_1(%arg0: i32) -> (i32, i32) {
    %c0_i32 = arith.constant 0 : i32
    %c0_i32_0 = arith.constant 0 : i32
    %c0_i32_1 = arith.constant 0 : i32
    return %c0_i32, %c0_i32_0 : i32, i32
  }
  func.func @transform_2(%arg0: i32) -> (i32, i32) {
    %c0_i32 = arith.constant 0 : i32
    %c0_i32_0 = arith.constant 0 : i32
    %c0_i32_1 = arith.constant 0 : i32
    return %c0_i32, %c0_i32_0 : i32, i32
  }
  func.func @transform_3(%arg0: i32) -> (i32, i32) {
    %c0_i32 = arith.constant 0 : i32
    %c0_i32_0 = arith.constant 0 : i32
    %c0_i32_1 = arith.constant 0 : i32
    return %c0_i32, %c0_i32_0 : i32, i32
  }
  func.func @transform_4(%arg0: i32) -> (i32, i32) {
    %c0_i32 = arith.constant 0 : i32
    %c0_i32_0 = arith.constant 0 : i32
    %c0_i32_1 = arith.constant 0 : i32
    return %c0_i32, %c0_i32_0 : i32, i32
  }
  func.func @transform_5(%arg0: i32) -> (i32, i32) {
    %c0_i32 = arith.constant 0 : i32
    %c0_i32_0 = arith.constant 0 : i32
    %c0_i32_1 = arith.constant 0 : i32
    return %c0_i32, %c0_i32_0 : i32, i32
  }
  func.func @transform_6(%arg0: i32) -> (i32, i32) {
    %c0_i32 = arith.constant 0 : i32
    %c0_i32_0 = arith.constant 0 : i32
    %c0_i32_1 = arith.constant 0 : i32
    return %c0_i32, %c0_i32_0 : i32, i32
  }
  func.func @transform_7(%arg0: i32) -> (i32, i32) {
    %c0_i32 = arith.constant 0 : i32
    %c0_i32_0 = arith.constant 0 : i32
    return %arg0, %c0_i32 : i32, i32
  }
}

</mosaic_0001>

<llo_original>
// kernel: dueling_forward.1
$region0: #{dueling_forward.1}
  #allocation0 [shape = 'u32[]', space=smem, size = 0x4, offset = 0x4, fixed_abs, tag = 'smem constant byte address 0x4 - core index']
  #allocation1 [shape = 'u32[144,128]{1,0:T(1,128)}', space=vmem, size = 0x12000, scoped, tag = 'internal scratch']
  %s0 = inlined_call_operand.vmem [shape: bf16[16,16], index: 0, kind: input, shape index: {}]
  %s1 = inlined_call_operand.vmem [shape: bf16[16,128], index: 1, kind: input, shape index: {}]
  %s2 = inlined_call_operand.vmem [shape: f32[1,128], index: 2, kind: input, shape index: {}]
  %s3 = inlined_call_operand.hbm [shape: bf16[128,256], index: 3, kind: input, shape index: {}]
  %s4 = inlined_call_operand.vmem [shape: f32[1,256], index: 4, kind: input, shape index: {}]
  %s5 = inlined_call_operand.hbm [shape: bf16[256,128], index: 5, kind: input, shape index: {}]
  %s6 = inlined_call_operand.vmem [shape: f32[1,128], index: 6, kind: input, shape index: {}]
  %s7 = inlined_call_operand.vmem [shape: f32[16,128], index: 7, kind: output, shape index: {}]
  %s8 = sld [smem:[#allocation0]]
  $region46: #{dueling_forward.1} parent=0
    _
  %s10 = ssub.s32 1, %s8
  %s11 = scalar_select 0, %s10, %s8
  $region1: #{dueling_forward.1} parent=0
    #allocation2 [shape = 'u8[65536]{0}', space=vmem, size = 0x10000, scoped, tag = 'input window, operand 3, single buffered']
    #allocation3 [shape = 's32[1]{0}', space=sflag, size = 0x4, scoped, tag = 'scoped memory for dueling_forward.1']
    #allocation4 [shape = 'u8[65536]{0}', space=vmem, size = 0x10000, scoped, tag = 'input window, operand 5, single buffered']
    #allocation5 [shape = 's32[1]{0}', space=sflag, size = 0x4, scoped, tag = 'scoped memory for dueling_forward.1']
    %12 = vsyncpa [#allocation3], 0
    %13 = vsyncpa [#allocation5], 0
    // Predicated region
    $region2: #{dueling_forward.1} parent=1 // pred_check
      _
    $region3: #{dueling_forward.1} parent=1 // pred_check_branch
      %15 = sbr.rel (0) target = $region5
    $region4: #{dueling_forward.1} parent=1 // pred_region
      _
    $region5: #{dueling_forward.1} parent=1 // pred_fallthru
      _
    // Predicated region
    $region6: #{dueling_forward.1} parent=1 // pred_check
      _
    $region7: #{dueling_forward.1} parent=1 // pred_check_branch
      %17 = sbr.rel (0) target = $region9
    $region8: #{dueling_forward.1} parent=1 // pred_region
      _
    $region9: #{dueling_forward.1} parent=1 // pred_fallthru
      _
    // Predicated region
    $region10: #{dueling_forward.1} parent=1 // pred_check
      _
    $region11: #{dueling_forward.1} parent=1 // pred_check_branch
      %19 = sbr.rel (0) target = $region13
    $region12: #{dueling_forward.1} parent=1 // pred_region
      _
    $region13: #{dueling_forward.1} parent=1 // pred_fallthru
      _
    // Predicated region
    $region14: #{dueling_forward.1} parent=1 // pred_check
      _
    $region15: #{dueling_forward.1} parent=1 // pred_check_branch
      %21 = sbr.rel (0) target = $region17
    $region16: #{dueling_forward.1} parent=1 // pred_region
      %s23 = ssub.s32 2048, 2048
      %24 = vsyncadd [#allocation3], %s23
      %s25 = sshll.u32 [#allocation2], 4
      %s26 = int_to_ptr.vmem [resolvable:$true] %s25
      %31 = dma.hbm_to_vmem [thread:$0]  %s3, 2048, %s26, [#allocation3], 128, 128, 8
    $region17: #{dueling_forward.1} parent=1 // pred_fallthru
      _
    // Predicated region
    $region18: #{dueling_forward.1} parent=1 // pred_check
      _
    $region19: #{dueling_forward.1} parent=1 // pred_check_branch
      %33 = sbr.rel (0) target = $region21
    $region20: #{dueling_forward.1} parent=1 // pred_region
      _
    $region21: #{dueling_forward.1} parent=1 // pred_fallthru
      _
    // Predicated region
    $region22: #{dueling_forward.1} parent=1 // pred_check
      _
    $region23: #{dueling_forward.1} parent=1 // pred_check_branch
      %35 = sbr.rel (0) target = $region25
    $region24: #{dueling_forward.1} parent=1 // pred_region
      %s37 = ssub.s32 2048, 2048
      %38 = vsyncadd [#allocation5], %s37
      %s39 = sshll.u32 [#allocation4], 4
      %s40 = int_to_ptr.vmem [resolvable:$true] %s39
      %45 = dma.hbm_to_vmem [thread:$0]  %s5, 2048, %s40, [#allocation5], 64, 64, 4
    $region25: #{dueling_forward.1} parent=1 // pred_fallthru
      _
    // Predicated region
    $region26: #{dueling_forward.1} parent=1 // pred_check
      _
    $region27: #{dueling_forward.1} parent=1 // pred_check_branch
      %47 = sbr.rel (0) target = $region29
    $region28: #{dueling_forward.1} parent=1 // pred_region
      _
    $region29: #{dueling_forward.1} parent=1 // pred_fallthru
      _
    // Predicated region
    $region30: #{dueling_forward.1} parent=1 // pred_check
      _
    $region31: #{dueling_forward.1} parent=1 // pred_check_branch
      %49 = sbr.rel (0) target = $region33
    $region32: #{dueling_forward.1} parent=1 // pred_region
      %50 = dma.done [#allocation3], 2048
    $region33: #{dueling_forward.1} parent=1 // pred_fallthru
      _
    // Predicated region
    $region34: #{dueling_forward.1} parent=1 // pred_check
      _
    $region35: #{dueling_forward.1} parent=1 // pred_check_branch
      %52 = sbr.rel (0) target = $region37
    $region36: #{dueling_forward.1} parent=1 // pred_region
      %53 = dma.done [#allocation5], 2048
    $region37: #{dueling_forward.1} parent=1 // pred_fallthru
      _
    %v55 = vld [vmem:[%s0] sm:$0xf]
    %v56 = vld [vmem:[%s0 + $0x4] sm:$0xf]
    %v57 = vld [vmem:[%s1] sm:$0xf]
    %v58 = vld [vmem:[%s1 + $0x4] sm:$0xf]
    %v59 = vld [vmem:[%s2] sm:$0x1]
    %v61 = vlaneseq
    %v62 = vshrl.u32 %v61, 7
    %v63 = vsub.s32 0, %v62
    %v64 = vrot.slane %v59, %v63
    %v68 = vunpack.c.l.b16 %v55
    %v69 = vunpack.c.l.b16 %v56
    %v70 = vpack.c.b16 %v69, %v68
    %v73 = vunpack.c.l.b16 %v57
    %v74 = vunpack.c.l.b16 %v58
    %v75 = vpack.c.b16 %v74, %v73
    %vm77 = vcmask 130048
    %v79 = vsel %vm77, %v70, 0
    %81 = vmatprep.subr.bf16.mxu0 0
    %82 = vmatpush1.bf16.msra.mxu0 %v75
    %83 = vmatprep.subr.bf16.mxu0 0
    %84 = vmatpush1.bf16.msra.mxu0 0
    %85 = vmatprep.subr.bf16.mxu0 0
    %86 = vmatpush1.bf16.msra.mxu0 0
    %87 = vmatprep.subr.bf16.mxu0 0
    %88 = vmatpush1.bf16.msra.mxu0 0
    %89 = vmatprep.subr.bf16.mxu0 0
    %90 = vmatpush1.bf16.msra.mxu0 0
    %91 = vmatprep.subr.bf16.mxu0 0
    %92 = vmatpush1.bf16.msra.mxu0 0
    %93 = vmatprep.subr.bf16.mxu0 0
    %94 = vmatpush1.bf16.msra.mxu0 0
    %95 = vmatprep.subr.bf16.mxu0 0
    %96 = vmatpush1.bf16.msra.mxu0 0
    %97 = vmatprep.subr.bf16.mxu0 0
    %98 = vmatpush1.bf16.msra.mxu0 0
    %99 = vmatprep.subr.bf16.mxu0 0
    %100 = vmatpush1.bf16.msra.mxu0 0
    %101 = vmatprep.subr.bf16.mxu0 0
    %102 = vmatpush1.bf16.msra.mxu0 0
    %103 = vmatprep.subr.bf16.mxu0 0
    %104 = vmatpush1.bf16.msra.mxu0 0
    %105 = vmatprep.subr.bf16.mxu0 0
    %106 = vmatpush1.bf16.msra.mxu0 0
    %107 = vmatprep.subr.bf16.mxu0 0
    %108 = vmatpush1.bf16.msra.mxu0 0
    %109 = vmatprep.subr.bf16.mxu0 0
    %110 = vmatpush1.bf16.msra.mxu0 0
    %111 = vmatprep.subr.bf16.mxu0 0
    %112 = vmatpush1.bf16.msra.mxu0 0
    %113 = vmatprep.mubr.bf16.mxu0 0
    %114 = vmatmul.mubr.bf16.gmra.mrb[0].mxu0 %v79
    %v115 = vpop.f32.mrb[0].mxu0
    %v116 = vadd.f32 %v64, %v115
    %v117 = vpop.f32.mrb[0].mxu0
    %v118 = vpop.f32.mrb[0].mxu0
    %v119 = vadd.f32 %v64, %v118
    %v120 = vpop.f32.mrb[0].mxu0
    %121 = vdwg.mxu0
    %v122 = vmax.f32 %v116, 0.0
    %v123 = vmax.f32 %v119, 0.0
    %v124 = vpack.c.bf16 %v123, %v122
    %v125 = vld [vmem:[#allocation2] sm:$0xff]
    %v126 = vld [vmem:[#allocation2 + $0x8] sm:$0xff]
    %v127 = vld [vmem:[#allocation2 + $0x10] sm:$0xff]
    %v128 = vld [vmem:[#allocation2 + $0x18] sm:$0xff]
    %v129 = vld [vmem:[#allocation2 + $0x20] sm:$0xff]
    %v130 = vld [vmem:[#allocation2 + $0x28] sm:$0xff]
    %v131 = vld [vmem:[#allocation2 + $0x30] sm:$0xff]
    %v132 = vld [vmem:[#allocation2 + $0x38] sm:$0xff]
    %v133 = vld [vmem:[#allocation2 + $0x40] sm:$0xff]
    %v134 = vld [vmem:[#allocation2 + $0x48] sm:$0xff]
    %v135 = vld [vmem:[#allocation2 + $0x50] sm:$0xff]
    %v136 = vld [vmem:[#allocation2 + $0x58] sm:$0xff]
    %v137 = vld [vmem:[#allocation2 + $0x60] sm:$0xff]
    %v138 = vld [vmem:[#allocation2 + $0x68] sm:$0xff]
    %v139 = vld [vmem:[#allocation2 + $0x70] sm:$0xff]
    %v140 = vld [vmem:[#allocation2 + $0x78] sm:$0xff]
    %v141 = vld [vmem:[%s4] sm:$0x3]
    %v143 = vlaneseq
    %v144 = vshrl.u32 %v143, 7
    %v145 = vsub.s32 0, %v144
    %v146 = vrot.slane %v141, %v145
    %v147 = vlaneseq
    %v148 = vshrl.u32 %v147, 7
    %v149 = vsub.s32 1, %v148
    %v150 = vrot.slane %v141, %v149
    %v169 = vunpack.c.l.b16 %v125
    %v170 = vunpack.c.h.b16 %v125
    %v171 = vunpack.c.l.b16 %v126
    %v172 = vunpack.c.h.b16 %v126
    %v173 = vunpack.c.l.b16 %v127
    %v174 = vunpack.c.h.b16 %v127
    %v175 = vunpack.c.l.b16 %v128
    %v176 = vunpack.c.h.b16 %v128
    %v177 = vunpack.c.l.b16 %v129
    %v178 = vunpack.c.h.b16 %v129
    %v179 = vunpack.c.l.b16 %v130
    %v180 = vunpack.c.h.b16 %v130
    %v181 = vunpack.c.l.b16 %v131
    %v182 = vunpack.c.h.b16 %v131
    %v183 = vunpack.c.l.b16 %v132
    %v184 = vunpack.c.h.b16 %v132
    %v185 = vunpack.c.l.b16 %v133
    %v186 = vunpack.c.h.b16 %v133
    %v187 = vunpack.c.l.b16 %v134
    %v188 = vunpack.c.h.b16 %v134
    %v189 = vunpack.c.l.b16 %v135
    %v190 = vunpack.c.h.b16 %v135
    %v191 = vunpack.c.l.b16 %v136
    %v192 = vunpack.c.h.b16 %v136
    %v193 = vunpack.c.l.b16 %v137
    %v194 = vunpack.c.h.b16 %v137
    %v195 = vunpack.c.l.b16 %v138
    %v196 = vunpack.c.h.b16 %v138
    %v197 = vunpack.c.l.b16 %v139
    %v198 = vunpack.c.h.b16 %v139
    %v199 = vunpack.c.l.b16 %v140
    %v200 = vunpack.c.h.b16 %v140
    %v201 = vpack.c.b16 %v171, %v169
    %v202 = vpack.c.b16 %v172, %v170
    %v203 = vpack.c.b16 %v175, %v173
    %v204 = vpack.c.b16 %v176, %v174
    %v205 = vpack.c.b16 %v179, %v177
    %v206 = vpack.c.b16 %v180, %v178
    %v207 = vpack.c.b16 %v183, %v181
    %v208 = vpack.c.b16 %v184, %v182
    %v209 = vpack.c.b16 %v187, %v185
    %v210 = vpack.c.b16 %v188, %v186
    %v211 = vpack.c.b16 %v191, %v189
    %v212 = vpack.c.b16 %v192, %v190
    %v213 = vpack.c.b16 %v195, %v193
    %v214 = vpack.c.b16 %v196, %v194
    %v215 = vpack.c.b16 %v199, %v197
    %v216 = vpack.c.b16 %v200, %v198
    %233 = vmatprep.subr.bf16.mxu0 %v202
    %234 = vmatpush1.bf16.msra.mxu0 %v201
    %235 = vmatprep.subr.bf16.mxu0 %v204
    %236 = vmatpush1.bf16.msra.mxu0 %v203
    %237 = vmatprep.subr.bf16.mxu0 %v206
    %238 = vmatpush1.bf16.msra.mxu0 %v205
    %239 = vmatprep.subr.bf16.mxu0 %v208
    %240 = vmatpush1.bf16.msra.mxu0 %v207
    %241 = vmatprep.subr.bf16.mxu0 %v210
    %242 = vmatpush1.bf16.msra.mxu0 %v209
    %243 = vmatprep.subr.bf16.mxu0 %v212
    %244 = vmatpush1.bf16.msra.mxu0 %v211
    %245 = vmatprep.subr.bf16.mxu0 %v214
    %246 = vmatpush1.bf16.msra.mxu0 %v213
    %247 = vmatprep.subr.bf16.mxu0 %v216
    %248 = vmatpush1.bf16.msra.mxu0 %v215
    %249 = vmatprep.subr.bf16.mxu0 0
    %250 = vmatpush1.bf16.msra.mxu0 0
    %251 = vmatprep.subr.bf16.mxu0 0
    %252 = vmatpush1.bf16.msra.mxu0 0
    %253 = vmatprep.subr.bf16.mxu0 0
    %254 = vmatpush1.bf16.msra.mxu0 0
    %255 = vmatprep.subr.bf16.mxu0 0
    %256 = vmatpush1.bf16.msra.mxu0 0
    %257 = vmatprep.subr.bf16.mxu0 0
    %258 = vmatpush1.bf16.msra.mxu0 0
    %259 = vmatprep.subr.bf16.mxu0 0
    %260 = vmatpush1.bf16.msra.mxu0 0
    %261 = vmatprep.subr.bf16.mxu0 0
    %262 = vmatpush1.bf16.msra.mxu0 0
    %263 = vmatprep.subr.bf16.mxu0 0
    %264 = vmatpush1.bf16.msra.mxu0 0
    %265 = vmatprep.mubr.bf16.mxu0 0
    %266 = vmatmul.mubr.bf16.gmra.mrb[0].mxu0 %v124
    %v267 = vpop.f32.mrb[0].mxu0
    %v268 = vadd.f32 %v146, %v267
    %v269 = vpop.f32.mrb[0].mxu0
    %v270 = vadd.f32 %v150, %v269
    %v271 = vpop.f32.mrb[0].mxu0
    %v272 = vadd.f32 %v146, %v271
    %v273 = vpop.f32.mrb[0].mxu0
    %v274 = vadd.f32 %v150, %v273
    %275 = vdwg.mxu0
    %v276 = vmax.f32 %v268, 0.0
    %v277 = vmax.f32 %v270, 0.0
    %v278 = vmax.f32 %v272, 0.0
    %v279 = vmax.f32 %v274, 0.0
    %v280 = vpack.c.bf16 %v278, %v276
    %v281 = vpack.c.bf16 %v279, %v277
    %v282 = vld [vmem:[#allocation4] sm:$0xf]
    %v283 = vld [vmem:[#allocation4 + $0x4] sm:$0xf]
    %v284 = vld [vmem:[#allocation4 + $0x8] sm:$0xf]
    %v285 = vld [vmem:[#allocation4 + $0xc] sm:$0xf]
    %v286 = vld [vmem:[#allocation4 + $0x10] sm:$0xf]
    %v287 = vld [vmem:[#allocation4 + $0x14] sm:$0xf]
    %v288 = vld [vmem:[#allocation4 + $0x18] sm:$0xf]
    %v289 = vld [vmem:[#allocation4 + $0x1c] sm:$0xf]
    %v290 = vld [vmem:[#allocation4 + $0x20] sm:$0xf]
    %v291 = vld [vmem:[#allocation4 + $0x24] sm:$0xf]
    %v292 = vld [vmem:[#allocation4 + $0x28] sm:$0xf]
    %v293 = vld [vmem:[#allocation4 + $0x2c] sm:$0xf]
    %v294 = vld [vmem:[#allocation4 + $0x30] sm:$0xf]
    %v295 = vld [vmem:[#allocation4 + $0x34] sm:$0xf]
    %v296 = vld [vmem:[#allocation4 + $0x38] sm:$0xf]
    %v297 = vld [vmem:[#allocation4 + $0x3c] sm:$0xf]
    %v298 = vld [vmem:[#allocation4 + $0x40] sm:$0xf]
    %v299 = vld [vmem:[#allocation4 + $0x44] sm:$0xf]
    %v300 = vld [vmem:[#allocation4 + $0x48] sm:$0xf]
    %v301 = vld [vmem:[#allocation4 + $0x4c] sm:$0xf]
    %v302 = vld [vmem:[#allocation4 + $0x50] sm:$0xf]
    %v303 = vld [vmem:[#allocation4 + $0x54] sm:$0xf]
    %v304 = vld [vmem:[#allocation4 + $0x58] sm:$0xf]
    %v305 = vld [vmem:[#allocation4 + $0x5c] sm:$0xf]
    %v306 = vld [vmem:[#allocation4 + $0x60] sm:$0xf]
    %v307 = vld [vmem:[#allocation4 + $0x64] sm:$0xf]
    %v308 = vld [vmem:[#allocation4 + $0x68] sm:$0xf]
    %v309 = vld [vmem:[#allocation4 + $0x6c] sm:$0xf]
    %v310 = vld [vmem:[#allocation4 + $0x70] sm:$0xf]
    %v311 = vld [vmem:[#allocation4 + $0x74] sm:$0xf]
    %v312 = vld [vmem:[#allocation4 + $0x78] sm:$0xf]
    %v313 = vld [vmem:[#allocation4 + $0x7c] sm:$0xf]
    %v314 = vld [vmem:[%s6] sm:$0x1]
    %v316 = vlaneseq
    %v317 = vshrl.u32 %v316, 7
    %v318 = vsub.s32 0, %v317
    %v319 = vrot.slane %v314, %v318
    %v353 = vunpack.c.l.b16 %v282
    %v354 = vunpack.c.l.b16 %v283
    %v355 = vunpack.c.l.b16 %v284
    %v356 = vunpack.c.l.b16 %v285
    %v357 = vunpack.c.l.b16 %v286
    %v358 = vunpack.c.l.b16 %v287
    %v359 = vunpack.c.l.b16 %v288
    %v360 = vunpack.c.l.b16 %v289
    %v361 = vunpack.c.l.b16 %v290
    %v362 = vunpack.c.l.b16 %v291
    %v363 = vunpack.c.l.b16 %v292
    %v364 = vunpack.c.l.b16 %v293
    %v365 = vunpack.c.l.b16 %v294
    %v366 = vunpack.c.l.b16 %v295
    %v367 = vunpack.c.l.b16 %v296
    %v368 = vunpack.c.l.b16 %v297
    %v369 = vunpack.c.l.b16 %v298
    %v370 = vunpack.c.l.b16 %v299
    %v371 = vunpack.c.l.b16 %v300
    %v372 = vunpack.c.l.b16 %v301
    %v373 = vunpack.c.l.b16 %v302
    %v374 = vunpack.c.l.b16 %v303
    %v375 = vunpack.c.l.b16 %v304
    %v376 = vunpack.c.l.b16 %v305
    %v377 = vunpack.c.l.b16 %v306
    %v378 = vunpack.c.l.b16 %v307
    %v379 = vunpack.c.l.b16 %v308
    %v380 = vunpack.c.l.b16 %v309
    %v381 = vunpack.c.l.b16 %v310
    %v382 = vunpack.c.l.b16 %v311
    %v383 = vunpack.c.l.b16 %v312
    %v384 = vunpack.c.l.b16 %v313
    %v385 = vpack.c.b16 %v354, %v353
    %v386 = vpack.c.b16 %v356, %v355
    %v387 = vpack.c.b16 %v358, %v357
    %v388 = vpack.c.b16 %v360, %v359
    %v389 = vpack.c.b16 %v362, %v361
    %v390 = vpack.c.b16 %v364, %v363
    %v391 = vpack.c.b16 %v366, %v365
    %v392 = vpack.c.b16 %v368, %v367
    %v393 = vpack.c.b16 %v370, %v369
    %v394 = vpack.c.b16 %v372, %v371
    %v395 = vpack.c.b16 %v374, %v373
    %v396 = vpack.c.b16 %v376, %v375
    %v397 = vpack.c.b16 %v378, %v377
    %v398 = vpack.c.b16 %v380, %v379
    %v399 = vpack.c.b16 %v382, %v381
    %v400 = vpack.c.b16 %v384, %v383
    %417 = vmatprep.subr.bf16.mxu0 0
    %418 = vmatpush1.bf16.msra.mxu0 %v385
    %419 = vmatprep.subr.bf16.mxu0 0
    %420 = vmatpush1.bf16.msra.mxu0 %v386
    %421 = vmatprep.subr.bf16.mxu0 0
    %422 = vmatpush1.bf16.msra.mxu0 %v387
    %423 = vmatprep.subr.bf16.mxu0 0
    %424 = vmatpush1.bf16.msra.mxu0 %v388
    %425 = vmatprep.subr.bf16.mxu0 0
    %426 = vmatpush1.bf16.msra.mxu0 %v389
    %427 = vmatprep.subr.bf16.mxu0 0
    %428 = vmatpush1.bf16.msra.mxu0 %v390
    %429 = vmatprep.subr.bf16.mxu0 0
    %430 = vmatpush1.bf16.msra.mxu0 %v391
    %431 = vmatprep.subr.bf16.mxu0 0
    %432 = vmatpush1.bf16.msra.mxu0 %v392
    %433 = vmatprep.subr.bf16.mxu0 0
    %434 = vmatpush1.bf16.msra.mxu0 %v393
    %435 = vmatprep.subr.bf16.mxu0 0
    %436 = vmatpush1.bf16.msra.mxu0 %v394
    %437 = vmatprep.subr.bf16.mxu0 0
    %438 = vmatpush1.bf16.msra.mxu0 %v395
    %439 = vmatprep.subr.bf16.mxu0 0
    %440 = vmatpush1.bf16.msra.mxu0 %v396
    %441 = vmatprep.subr.bf16.mxu0 0
    %442 = vmatpush1.bf16.msra.mxu0 %v397
    %443 = vmatprep.subr.bf16.mxu0 0
    %444 = vmatpush1.bf16.msra.mxu0 %v398
    %445 = vmatprep.subr.bf16.mxu0 0
    %446 = vmatpush1.bf16.msra.mxu0 %v399
    %447 = vmatprep.subr.bf16.mxu0 0
    %448 = vmatpush1.bf16.msra.mxu0 %v400
    %449 = vmatprep.mubr.bf16.mxu0 %v281
    %450 = vmatmul.mubr.bf16.gmra.mrb[0].mxu0 %v280
    %v451 = vpop.f32.mrb[0].mxu0
    %v452 = vadd.f32 %v319, %v451
    %v453 = vpop.f32.mrb[0].mxu0
    %v454 = vpop.f32.mrb[0].mxu0
    %v455 = vadd.f32 %v319, %v454
    %v456 = vpop.f32.mrb[0].mxu0
    %457 = vdwg.mxu0
    %458 = vst [vmem:[%s7] sm:$0xff] %v452
    %459 = vst [vmem:[%s7 + $0x8] sm:$0xff] %v455
    // Predicated region
    $region38: #{dueling_forward.1} parent=1 // pred_check
      _
    $region39: #{dueling_forward.1} parent=1 // pred_check_branch
      %461 = sbr.rel (0) target = $region41
    $region40: #{dueling_forward.1} parent=1 // pred_region
      _
    $region41: #{dueling_forward.1} parent=1 // pred_fallthru
      _
    // Predicated region
    $region42: #{dueling_forward.1} parent=1 // pred_check
      _
    $region43: #{dueling_forward.1} parent=1 // pred_check_branch
      %463 = sbr.rel (0) target = $region45
    $region44: #{dueling_forward.1} parent=1 // pred_region
      _
    $region45: #{dueling_forward.1} parent=1 // pred_fallthru
      _
    %464 = vsyncpa [#allocation3], 1
    %465 = vsyncpa [#allocation5], 1

</llo_original>
